<compile_context>
chip_gen: v5e
topology: v5e:2x2
jax: 0.10.0
libtpu: 0.0.40
codegen_flags: <defaults>
</compile_context>

<pallas_src>
import jax
import jax.numpy as jnp
from jax.experimental import pallas as pl
from jax.experimental.pallas import tpu as pltpu

NUM_SUBJECTS = 388


def _round_up(x, m):
    return (x + m - 1) // m * m


def _pad2d(a, rows, cols):
    r, c = a.shape
    return jnp.pad(a, ((0, rows - r), (0, cols - c)))


def _pad1d(v, width):
    return jnp.pad(v, (0, width - v.shape[0]))


def make_params(key, num_input, g=50, h=50, bottleneck=25, meta_bottleneck=5):
    """Deterministic parameter init (PyTorch nn.Linear-style uniform ranges)."""
    def linear(k, fan_in, fan_out):
        k1, k2 = jax.random.split(k)
        bound = 1.0 / jnp.sqrt(fan_in)
        # stored as (out, in) like PyTorch; transposed/padded at call time
        W = jax.random.uniform(k1, (fan_out, fan_in), jnp.float32, -bound, bound)
        b = jax.random.uniform(k2, (fan_out,), jnp.float32, -bound, bound)
        return W, b

    keys = jax.random.split(key, 5)
    params = {}
    params["meta"] = linear(keys[0], NUM_SUBJECTS, meta_bottleneck)
    params["g"] = linear(keys[1], num_input, g)
    params["g_two"] = linear(keys[2], g, bottleneck)
    params["h_two"] = linear(keys[3], meta_bottleneck + bottleneck + 1, h)
    params["h"] = linear(keys[4], h, num_input)
    return params


def autoencoder_forward(params, inputs, meta, beta, *,
                        block_batch=512, compute_dtype=jnp.bfloat16,
                        out_dtype=None):
    """Batched forward: inputs (B, num_input), meta (B, num_subjects), scalar beta."""
    gW, gb = params["g"]
    g2W, g2b = params["g_two"]
    mW, mb = params["meta"]
    h2W, h2b = params["h_two"]
    hW, hb = params["h"]

    num_input = gW.shape[1]
    g = gW.shape[0]
    bottleneck = g2W.shape[0]
    meta_bottleneck = mW.shape[0]
    num_subjects = mW.shape[1]
    h = h2W.shape[0]

    B = inputs.shape[0]
    assert meta.shape == (B, num_subjects)
    assert block_batch >= 8 and block_batch % 8 == 0
    if out_dtype is None:
        out_dtype = inputs.dtype

    # Padded (lane-aligned) widths.
    NI = _round_up(num_input, 128)                       # x width / decode width
    G1 = _round_up(g, 128)                               # sigmoid(g(x)) width
    E = _round_up(bottleneck + meta_bottleneck, 128)     # fused encode width
    H1 = _round_up(h, 128)                               # hidden width
    WMAX = max(NI, G1, E, H1)

    # Batch tiling: large tiles, but keep >= 2 grid steps when B allows (v7x megacore).
    half = _round_up(max(1, (B + 1) // 2), 8)
    TB = min(block_batch, half)
    B_pad = _round_up(B, TB)

    # Fold scalar beta into an effective h_two bias: b2_eff = b2 + beta * W2[:, bn+mb].
    beta_f = jnp.asarray(beta, jnp.float32)
    h2b_eff = h2b + beta_f * h2W[:, bottleneck + meta_bottleneck]

    # --- Single padded weight slab (row blocks, all offsets multiples of 128) ---
    w_parts = [
        _pad2d(gW.T, NI, WMAX),                                     # g
        _pad2d(g2W.T, G1, WMAX),                                    # g_two (-> lanes [0, bn))
        _pad2d(h2W.T[:bottleneck + meta_bottleneck, :], E, WMAX),   # h_two ([students; meta] rows)
        _pad2d(hW.T, H1, WMAX),                                     # h
    ]
    w_slab = jnp.concatenate(w_parts, axis=0).astype(compute_dtype)
    o_g = 0
    o_g2 = o_g + NI
    o_h2 = o_g2 + G1
    o_h = o_h2 + E
    W_ROWS = o_h + H1

    # Meta weight kept separate at its native K=num_subjects, output columns shifted
    # to lanes [bn, bn+mb) so its logits are disjoint from g_two's (enables fusion).
    mw_block = jnp.zeros((num_subjects, E), jnp.float32)
    mw_block = mw_block.at[:, bottleneck:bottleneck + meta_bottleneck].set(mW.T)
    mw_block = mw_block.astype(compute_dtype)

    # --- Single bias slab (f32, (8, WMAX)); row 1 fuses g_two and meta biases ---
    b_enc = jnp.zeros((WMAX,), jnp.float32)
    b_enc = b_enc.at[:bottleneck].set(g2b)
    b_enc = b_enc.at[bottleneck:bottleneck + meta_bottleneck].set(mb)
    b_rows = jnp.stack([
        _pad1d(gb, WMAX),
        b_enc,
        _pad1d(h2b_eff, WMAX),
        _pad1d(hb, WMAX),
    ])
    b_slab = jnp.pad(b_rows, ((0, 8 - b_rows.shape[0]), (0, 0)))

    # --- Activations: cast to compute dtype first (half the HBM bytes), pad batch;
    #     meta keeps its native column width (no 388->512 pad round-trip). ---
    x_p = jnp.pad(inputs.astype(compute_dtype),
                  ((0, B_pad - B), (0, NI - num_input)))
    meta_p = jnp.pad(meta.astype(compute_dtype), ((0, B_pad - B), (0, 0)))

    def kernel(x_ref, meta_ref, w_ref, mw_ref, b_ref, out_ref):
        cdt = w_ref.dtype
        f32 = jnp.float32
        sig = jax.nn.sigmoid

        # h1 = sigmoid(g(inputs))            (dropout = identity in eval mode)
        h1 = sig(jnp.dot(x_ref[...], w_ref[o_g:o_g + NI, 0:G1],
                         preferred_element_type=f32) + b_ref[0:1, 0:G1])

        # Fused encode: lanes [0,bn) carry g_two logits, [bn,bn+mb) carry meta logits.
        enc = sig(jnp.dot(h1.astype(cdt), w_ref[o_g2:o_g2 + G1, 0:E],
                          preferred_element_type=f32)
                  + jnp.dot(meta_ref[...], mw_ref[...],
                            preferred_element_type=f32)
                  + b_ref[1:2, 0:E])

        # hidden = sigmoid(h_two(cat([es, em, beta])))   (beta folded into the bias row)
        hid = sig(jnp.dot(enc.astype(cdt), w_ref[o_h2:o_h2 + E, 0:H1],
                          preferred_element_type=f32) + b_ref[2:3, 0:H1])

        # decode = sigmoid(h(hidden))
        out_ref[...] = sig(jnp.dot(hid.astype(cdt), w_ref[o_h:o_h + H1, 0:NI],
                                   preferred_element_type=f32)
                           + b_ref[3:4, 0:NI]).astype(out_ref.dtype)

    # Rough VMEM estimate (double-buffered tiles + resident weights); raise the scoped
    # limit only if a very large TB (e.g. multi-thousand rows) would exceed the default.
    act_bytes = jnp.dtype(compute_dtype).itemsize
    out_bytes = jnp.dtype(out_dtype).itemsize
    vmem_est = (2 * TB * (NI + num_subjects) * act_bytes
                + 2 * TB * NI * out_bytes
                + 2 * (W_ROWS * WMAX + num_subjects * E) * act_bytes
                + 2 * 8 * WMAX * 4)
    compiler_kwargs = dict(dimension_semantics=("parallel",))
    if vmem_est > 16 * 1024 * 1024:
        compiler_kwargs["vmem_limit_bytes"] = int(min(1.5 * vmem_est, 64 * 1024 * 1024))

    out = pl.pallas_call(
        kernel,
        out_shape=jax.ShapeDtypeStruct((B_pad, NI), out_dtype),
        grid=(B_pad // TB,),
        in_specs=[
            pl.BlockSpec((TB, NI), lambda b: (b, 0)),             # inputs tile
            pl.BlockSpec((TB, num_subjects), lambda b: (b, 0)),   # meta tile (native width)
            pl.BlockSpec((W_ROWS, WMAX), lambda b: (0, 0)),       # weight slab (fetched once)
            pl.BlockSpec((num_subjects, E), lambda b: (0, 0)),    # meta weight (fetched once)
            pl.BlockSpec((8, WMAX), lambda b: (0, 0)),            # bias slab (fetched once)
        ],
        out_specs=pl.BlockSpec((TB, NI), lambda b: (b, 0)),
        compiler_params=pltpu.CompilerParams(**compiler_kwargs),
    )(x_p, meta_p, w_slab, mw_block, b_slab)

    # Consumers that can accept the padded (B_pad, NI) lane-dense buffer should skip this.
    return out[:B, :num_input]


def autoencoder_reference(params, inputs, meta, beta):
    """Pure-JAX reference (eval-mode dropout), row-batched version of the torch forward."""
    gW, gb = params["g"]
    g2W, g2b = params["g_two"]
    mW, mb = params["meta"]
    h2W, h2b = params["h_two"]
    hW, hb = params["h"]
    sig = jax.nn.sigmoid
    es = sig(sig(inputs @ gW.T + gb) @ g2W.T + g2b)
    em = sig(meta @ mW.T + mb)
    betas = jnp.full((inputs.shape[0], 1), beta, jnp.float32)
    enc = jnp.concatenate([es, em, betas], axis=1)
    return sig(sig(enc @ h2W.T + h2b) @ hW.T + hb)


if __name__ == "__main__":
    num_input = 64
    batch = 13  # exercises batch padding (13 -> 16) and 2 grid steps of TB=8

    key = jax.random.PRNGKey(0)
    k_param, k_x, k_meta = jax.random.split(key, 3)

    params = make_params(k_param, num_input)
    inputs = jax.random.uniform(k_x, (batch, num_input), jnp.float32)       # user vectors
    meta = jax.random.uniform(k_meta, (batch, NUM_SUBJECTS), jnp.float32)   # subject meta vectors
    beta = 0.37

    ref = autoencoder_reference(params, inputs, meta, beta)

    # f32 matmul path (exactness check).
    out_f32 = autoencoder_forward(params, inputs, meta, beta,
                                  compute_dtype=jnp.float32)
    out_f32 = jax.block_until_ready(out_f32)
    assert out_f32.shape == (batch, num_input)
    assert jnp.allclose(out_f32, ref, atol=5e-4, rtol=5e-4), "f32 mismatch vs reference"

    # bf16 matmul path (default; recommended on v5e/v6e/v7x); f32 accumulate + f32 sigmoid.
    out_bf16 = autoencoder_forward(params, inputs, meta, beta,
                                   compute_dtype=jnp.bfloat16)
    out_bf16 = jax.block_until_ready(out_bf16)
    assert out_bf16.shape == (batch, num_input)
    assert jnp.allclose(out_bf16, ref, atol=3e-2, rtol=3e-2), "bf16 mismatch vs reference"

    print("KERNEL_OK")
</pallas_src>

<mosaic_0001>
module attributes {stable_mosaic.version = 11 : i64} {
  func.func @kernel(%arg0: i32, %arg1: memref<8x128xf32, #tpu.memory_space<vmem>>, %arg2: memref<8x388xf32, #tpu.memory_space<vmem>>, %arg3: memref<512x128xf32, #tpu.memory_space<vmem>>, %arg4: memref<388x128xf32, #tpu.memory_space<vmem>>, %arg5: memref<8x128xf32, #tpu.memory_space<vmem>>, %arg6: memref<8x128xf32, #tpu.memory_space<vmem>>) attributes {dimension_semantics = [#tpu.dimension_semantics<parallel>], iteration_bounds = array<i64: 2>, scalar_prefetch = 0 : i64, scratch_operands = 0 : i64, tpu.core_type = #tpu.core_type<tc>, window_params = [{transform_indices = @transform_0, window_bounds = array<i64: 8, 128>}, {transform_indices = @transform_1, window_bounds = array<i64: 8, 388>}, {pipeline_mode = #tpu.pipeline_mode<synchronous>, transform_indices = @transform_2, window_bounds = array<i64: 512, 128>}, {pipeline_mode = #tpu.pipeline_mode<synchronous>, transform_indices = @transform_3, window_bounds = array<i64: 388, 128>}, {pipeline_mode = #tpu.pipeline_mode<synchronous>, transform_indices = @transform_4, window_bounds = array<i64: 8, 128>}, {transform_indices = @transform_5, window_bounds = array<i64: 8, 128>}]} {
    %c0 = arith.constant 0 : index
    %c0_0 = arith.constant 0 : index
    %0 = vector.load %arg1[%c0, %c0_0] : memref<8x128xf32, #tpu.memory_space<vmem>>, vector<8x128xf32>
    %c0_1 = arith.constant 0 : index
    %c0_2 = arith.constant 0 : index
    %1 = vector.load %arg3[%c0_1, %c0_2] : memref<512x128xf32, #tpu.memory_space<vmem>>, vector<128x128xf32>
    %cst = arith.constant dense<0.000000e+00> : vector<8x128xf32>
    %2 = tpu.matmul %0, %1, %cst {dimension_numbers = #tpu.dot_dimension_numbers<[1], [0], [0], [1], [0, 0, 1, 1], [], []>} : vector<8x128xf32>, vector<128x128xf32>, vector<8x128xf32> -> vector<8x128xf32>
    %c0_3 = arith.constant 0 : index
    %c0_4 = arith.constant 0 : index
    %3 = vector.load %arg5[%c0_3, %c0_4] : memref<8x128xf32, #tpu.memory_space<vmem>>, vector<1x128xf32>
    %4 = vector.broadcast %3 : vector<1x128xf32> to vector<8x128xf32>
    %5 = arith.addf %2, %4 : vector<8x128xf32>
    %6 = arith.negf %5 : vector<8x128xf32>
    %7 = math.exp %6 : vector<8x128xf32>
    %cst_5 = arith.constant 1.000000e+00 : f32
    %8 = vector.broadcast %cst_5 : f32 to vector<8x128xf32>
    %9 = arith.addf %8, %7 : vector<8x128xf32>
    %10 = arith.divf %8, %9 : vector<8x128xf32>
    %c128 = arith.constant 128 : index
    %c0_6 = arith.constant 0 : index
    %11 = vector.load %arg3[%c128, %c0_6] : memref<512x128xf32, #tpu.memory_space<vmem>>, vector<128x128xf32>
    %cst_7 = arith.constant dense<0.000000e+00> : vector<8x128xf32>
    %12 = tpu.matmul %10, %11, %cst_7 {dimension_numbers = #tpu.dot_dimension_numbers<[1], [0], [0], [1], [0, 0, 1, 1], [], []>} : vector<8x128xf32>, vector<128x128xf32>, vector<8x128xf32> -> vector<8x128xf32>
    %c0_8 = arith.constant 0 : index
    %c0_9 = arith.constant 0 : index
    %13 = vector.load %arg2[%c0_8, %c0_9] : memref<8x388xf32, #tpu.memory_space<vmem>>, vector<8x388xf32>
    %c0_10 = arith.constant 0 : index
    %c0_11 = arith.constant 0 : index
    %14 = vector.load %arg4[%c0_10, %c0_11] : memref<388x128xf32, #tpu.memory_space<vmem>>, vector<388x128xf32>
    %cst_12 = arith.constant dense<0.000000e+00> : vector<8x128xf32>
    %15 = tpu.matmul %13, %14, %cst_12 {dimension_numbers = #tpu.dot_dimension_numbers<[1], [0], [0], [1], [0, 0, 1, 1], [], []>} : vector<8x388xf32>, vector<388x128xf32>, vector<8x128xf32> -> vector<8x128xf32>
    %16 = arith.addf %12, %15 : vector<8x128xf32>
    %c1 = arith.constant 1 : index
    %c0_13 = arith.constant 0 : index
    %17 = vector.load %arg5[%c1, %c0_13] : memref<8x128xf32, #tpu.memory_space<vmem>>, vector<1x128xf32>
    %18 = vector.broadcast %17 : vector<1x128xf32> to vector<8x128xf32>
    %19 = arith.addf %16, %18 : vector<8x128xf32>
    %20 = arith.negf %19 : vector<8x128xf32>
    %21 = math.exp %20 : vector<8x128xf32>
    %cst_14 = arith.constant 1.000000e+00 : f32
    %22 = vector.broadcast %cst_14 : f32 to vector<8x128xf32>
    %23 = arith.addf %22, %21 : vector<8x128xf32>
    %24 = arith.divf %22, %23 : vector<8x128xf32>
    %c256 = arith.constant 256 : index
    %c0_15 = arith.constant 0 : index
    %25 = vector.load %arg3[%c256, %c0_15] : memref<512x128xf32, #tpu.memory_space<vmem>>, vector<128x128xf32>
    %cst_16 = arith.constant dense<0.000000e+00> : vector<8x128xf32>
    %26 = tpu.matmul %24, %25, %cst_16 {dimension_numbers = #tpu.dot_dimension_numbers<[1], [0], [0], [1], [0, 0, 1, 1], [], []>} : vector<8x128xf32>, vector<128x128xf32>, vector<8x128xf32> -> vector<8x128xf32>
    %c2 = arith.constant 2 : index
    %c0_17 = arith.constant 0 : index
    %27 = vector.load %arg5[%c2, %c0_17] : memref<8x128xf32, #tpu.memory_space<vmem>>, vector<1x128xf32>
    %28 = vector.broadcast %27 : vector<1x128xf32> to vector<8x128xf32>
    %29 = arith.addf %26, %28 : vector<8x128xf32>
    %30 = arith.negf %29 : vector<8x128xf32>
    %31 = math.exp %30 : vector<8x128xf32>
    %cst_18 = arith.constant 1.000000e+00 : f32
    %32 = vector.broadcast %cst_18 : f32 to vector<8x128xf32>
    %33 = arith.addf %32, %31 : vector<8x128xf32>
    %34 = arith.divf %32, %33 : vector<8x128xf32>
    %c384 = arith.constant 384 : index
    %c0_19 = arith.constant 0 : index
    %35 = vector.load %arg3[%c384, %c0_19] : memref<512x128xf32, #tpu.memory_space<vmem>>, vector<128x128xf32>
    %cst_20 = arith.constant dense<0.000000e+00> : vector<8x128xf32>
    %36 = tpu.matmul %34, %35, %cst_20 {dimension_numbers = #tpu.dot_dimension_numbers<[1], [0], [0], [1], [0, 0, 1, 1], [], []>} : vector<8x128xf32>, vector<128x128xf32>, vector<8x128xf32> -> vector<8x128xf32>
    %c3 = arith.constant 3 : index
    %c0_21 = arith.constant 0 : index
    %37 = vector.load %arg5[%c3, %c0_21] : memref<8x128xf32, #tpu.memory_space<vmem>>, vector<1x128xf32>
    %38 = vector.broadcast %37 : vector<1x128xf32> to vector<8x128xf32>
    %39 = arith.addf %36, %38 : vector<8x128xf32>
    %40 = arith.negf %39 : vector<8x128xf32>
    %41 = math.exp %40 : vector<8x128xf32>
    %cst_22 = arith.constant 1.000000e+00 : f32
    %42 = vector.broadcast %cst_22 : f32 to vector<8x128xf32>
    %43 = arith.addf %42, %41 : vector<8x128xf32>
    %44 = arith.divf %42, %43 : vector<8x128xf32>
    %c0_23 = arith.constant 0 : index
    %c0_24 = arith.constant 0 : index
    %45 = vector.load %arg6[%c0_23, %c0_24] : memref<8x128xf32, #tpu.memory_space<vmem>>, vector<8x128xf32>
    tpu.vector_store %arg6[%c0_23, %c0_24], %44 {strides = array<i32>} : memref<8x128xf32, #tpu.memory_space<vmem>>, vector<8x128xf32>,
    return
  }
  func.func @transform_0(%arg0: i32) -> (i32, i32) {
    %c0_i32 = arith.constant 0 : i32
    %c0_i32_0 = arith.constant 0 : i32
    return %arg0, %c0_i32 : i32, i32
  }
  func.func @transform_1(%arg0: i32) -> (i32, i32) {
    %c0_i32 = arith.constant 0 : i32
    %c0_i32_0 = arith.constant 0 : i32
    return %arg0, %c0_i32 : i32, i32
  }
  func.func @transform_2(%arg0: i32) -> (i32, i32) {
    %c0_i32 = arith.constant 0 : i32
    %c0_i32_0 = arith.constant 0 : i32
    %c0_i32_1 = arith.constant 0 : i32
    return %c0_i32, %c0_i32_0 : i32, i32
  }
  func.func @transform_3(%arg0: i32) -> (i32, i32) {
    %c0_i32 = arith.constant 0 : i32
    %c0_i32_0 = arith.constant 0 : i32
    %c0_i32_1 = arith.constant 0 : i32
    return %c0_i32, %c0_i32_0 : i32, i32
  }
  func.func @transform_4(%arg0: i32) -> (i32, i32) {
    %c0_i32 = arith.constant 0 : i32
    %c0_i32_0 = arith.constant 0 : i32
    %c0_i32_1 = arith.constant 0 : i32
    return %c0_i32, %c0_i32_0 : i32, i32
  }
  func.func @transform_5(%arg0: i32) -> (i32, i32) {
    %c0_i32 = arith.constant 0 : i32
    %c0_i32_0 = arith.constant 0 : i32
    return %arg0, %c0_i32 : i32, i32
  }
}

</mosaic_0001>

<llo_original>
// kernel: tpu_custom_call.1
$region0: #{tpu_custom_call.1}
  #allocation0 [shape = 'u32[]', space=smem, size = 0x4, offset = 0x4, fixed_abs, tag = 'smem constant byte address 0x4 - core index']
  #allocation1 [shape = 'u32[72,128]{1,0:T(1,128)}', space=vmem, size = 0x9000, scoped, tag = 'internal scratch']
  %s0 = inlined_call_operand.hbm [shape: f32[16,128], index: 0, kind: input, shape index: {}]
  %s1 = inlined_call_operand.hbm [shape: f32[16,388], index: 1, kind: input, shape index: {}]
  %s2 = inlined_call_operand.hbm [shape: f32[512,128], index: 2, kind: input, shape index: {}]
  %s3 = inlined_call_operand.hbm [shape: f32[388,128], index: 3, kind: input, shape index: {}]
  %s4 = inlined_call_operand.hbm [shape: f32[8,128], index: 4, kind: input, shape index: {}]
  %s5 = inlined_call_operand.hbm [shape: f32[16,128], index: 5, kind: output, shape index: {}]
  %s6 = sld [smem:[#allocation0]]
  $region73: #{tpu_custom_call.1} parent=0
    _
  %s8 = ssub.s32 1, %s6
  %s9 = scalar_select 0, %s8, %s6
  $region1: #{tpu_custom_call.1} parent=0
    #allocation2 [shape = 'u8[8192]{0}', space=vmem, size = 0x2000, scoped, tag = 'input window, operand 0']
    #allocation3 [shape = 's32[2]{0}', space=sflag, size = 0x8, scoped, tag = 'scoped memory for tpu_custom_call.1']
    #allocation4 [shape = 's32[2]{0}', space=sflag, size = 0x8, scoped, tag = 'scoped memory for tpu_custom_call.1']
    #allocation5 [shape = 'u8[32768]{0}', space=vmem, size = 0x8000, scoped, tag = 'input window, operand 1']
    #allocation6 [shape = 's32[2]{0}', space=sflag, size = 0x8, scoped, tag = 'scoped memory for tpu_custom_call.1']
    #allocation7 [shape = 'u8[262144]{0}', space=vmem, size = 0x40000, scoped, tag = 'input window, operand 2, single buffered']
    #allocation8 [shape = 'u8[200704]{0}', space=vmem, size = 0x31000, scoped, tag = 'input window, operand 3, single buffered']
    #allocation9 [shape = 's32[1]{0}', space=sflag, size = 0x4, scoped, tag = 'scoped memory for tpu_custom_call.1']
    #allocation10 [shape = 'u8[4096]{0}', space=vmem, size = 0x1000, scoped, tag = 'input window, operand 4, single buffered']
    #allocation11 [shape = 'u8[8192]{0}', space=vmem, size = 0x2000, scoped, tag = 'output window, operand 0']
    %10 = vsyncpa [#allocation3], 0
    %s11 = scalar_lea.sflag [#allocation3], 1
    %12 = vsyncpa %s11, 0
    %13 = vsyncpa [#allocation6], 0
    %s14 = scalar_lea.sflag [#allocation6], 1
    %15 = vsyncpa %s14, 0
    %16 = vsyncpa [#allocation9], 0
    %17 = vsyncpa [#allocation4], 0
    %s18 = scalar_lea.sflag [#allocation4], 1
    %19 = vsyncpa %s18, 0
    loop: start=0, step=1, limit=4
    $region2: #{tpu_custom_call.1} parent=1 // loop_pre_header
      _
    $region3: #{tpu_custom_call.1} parent=1 // loop_header
      %s21 = sphi 0, %s25
      %p22 = scmp.ge.s32.totalorder %s21, 4
      %s31 = sphi 0, %s33
      %s34 = sphi 0, %s31
      %s35 = sphi 0, %s34
      %s51 = sphi 0, %s35
      %s57 = sphi 0, %s59
      %s60 = sphi 0, %s57
      %s61 = sphi 0, %s60
      %s77 = sphi 0, %s61
      %s81 = sphi 0, %s81
      %s83 = sphi 0, %s81
      %s84 = sphi 0, %s83
      %s98 = sphi 0, %s84
      %s102 = sphi 0, %s102
      %s104 = sphi 0, %s102
      %s105 = sphi 0, %s104
      %s119 = sphi 0, %s105
      %s123 = sphi 0, %s123
      %s125 = sphi 0, %s123
      %s126 = sphi 0, %s125
      %s140 = sphi 0, %s126
      %s146 = sphi 0, %s148
      %s149 = sphi 0, %s146
      %s150 = sphi 0, %s149
      %s166 = sphi 0, %s150
    $region4: #{tpu_custom_call.1} parent=1 // loop_header_branch
      %24 = sbr.rel (%p22) target = $region8
    $region5: #{tpu_custom_call.1} parent=1 // loop_body
      %s26 = ssub.s32 %s21, 1
      %s27 = ssub.s32 %s21, 2
      %s28 = sadd.s32 %s21, 1
      %s29 = ssub.s32 %s21, %s28
      %p30 = scmp.eq.s32.totalorder %s29, 0
      %s32 = sadd.s32 %s31, 1
      %s33 = scalar_select %p30, %s31, %s32
      %p36 = pneg %p30
      %p37 = scmp.eq.s32.totalorder %s21, 1
      %p38 = por %p36, %p37
      %p39 = scmp.ne.s32.totalorder %s31, %s34
      %p40 = scmp.eq.s32.totalorder %s21, 0
      %p41 = por %p39, %p40
      %p42 = scmp.ne.s32.totalorder %s31, %s34
      %p43 = scmp.eq.s32.totalorder %s26, 1
      %p44 = por %p42, %p43
      %p45 = scmp.ne.s32.totalorder %s34, %s35
      %p46 = scmp.eq.s32.totalorder %s26, 0
      %p47 = por %p45, %p46
      %p48 = scmp.ne.s32.totalorder %s34, %s35
      %p49 = scmp.eq.s32.totalorder %s27, 1
      %p50 = por %p48, %p49
      %p52 = scmp.ne.s32.totalorder %s35, %s51
      %p53 = scmp.eq.s32.totalorder %s27, 0
      %p54 = por %p52, %p53
      %s55 = ssub.s32 %s21, %s28
      %p56 = scmp.eq.s32.totalorder %s55, 0
      %s58 = sadd.s32 %s57, 1
      %s59 = scalar_select %p56, %s57, %s58
      %p62 = pneg %p56
      %p63 = scmp.eq.s32.totalorder %s21, 1
      %p64 = por %p62, %p63
      %p65 = scmp.ne.s32.totalorder %s57, %s60
      %p66 = scmp.eq.s32.totalorder %s21, 0
      %p67 = por %p65, %p66
      %p68 = scmp.ne.s32.totalorder %s57, %s60
      %p69 = scmp.eq.s32.totalorder %s26, 1
      %p70 = por %p68, %p69
      %p71 = scmp.ne.s32.totalorder %s60, %s61
      %p72 = scmp.eq.s32.totalorder %s26, 0
      %p73 = por %p71, %p72
      %p74 = scmp.ne.s32.totalorder %s60, %s61
      %p75 = scmp.eq.s32.totalorder %s27, 1
      %p76 = por %p74, %p75
      %p78 = scmp.ne.s32.totalorder %s61, %s77
      %p79 = scmp.eq.s32.totalorder %s27, 0
      %p80 = por %p78, %p79
      %s82 = sadd.s32 %s81, 1
      %p85 = scmp.eq.s32.totalorder %s21, 1
      %p86 = scmp.ne.s32.totalorder %s81, %s83
      %p87 = scmp.eq.s32.totalorder %s21, 0
      %p88 = por %p86, %p87
      %p89 = scmp.ne.s32.totalorder %s81, %s83
      %p90 = scmp.eq.s32.totalorder %s26, 1
      %p91 = por %p89, %p90
      %p92 = scmp.ne.s32.totalorder %s83, %s84
      %p93 = scmp.eq.s32.totalorder %s26, 0
      %p94 = por %p92, %p93
      %p95 = scmp.ne.s32.totalorder %s83, %s84
      %p96 = scmp.eq.s32.totalorder %s27, 1
      %p97 = por %p95, %p96
      %p99 = scmp.ne.s32.totalorder %s84, %s98
      %p100 = scmp.eq.s32.totalorder %s27, 0
      %p101 = por %p99, %p100
      %s103 = sadd.s32 %s102, 1
      %p106 = scmp.eq.s32.totalorder %s21, 1
      %p107 = scmp.ne.s32.totalorder %s102, %s104
      %p108 = scmp.eq.s32.totalorder %s21, 0
      %p109 = por %p107, %p108
      %p110 = scmp.ne.s32.totalorder %s102, %s104
      %p111 = scmp.eq.s32.totalorder %s26, 1
      %p112 = por %p110, %p111
      %p113 = scmp.ne.s32.totalorder %s104, %s105
      %p114 = scmp.eq.s32.totalorder %s26, 0
      %p115 = por %p113, %p114
      %p116 = scmp.ne.s32.totalorder %s104, %s105
      %p117 = scmp.eq.s32.totalorder %s27, 1
      %p118 = por %p116, %p117
      %p120 = scmp.ne.s32.totalorder %s105, %s119
      %p121 = scmp.eq.s32.totalorder %s27, 0
      %p122 = por %p120, %p121
      %s124 = sadd.s32 %s123, 1
      %p127 = scmp.eq.s32.totalorder %s21, 1
      %p128 = scmp.ne.s32.totalorder %s123, %s125
      %p129 = scmp.eq.s32.totalorder %s21, 0
      %p130 = por %p128, %p129
      %p131 = scmp.ne.s32.totalorder %s123, %s125
      %p132 = scmp.eq.s32.totalorder %s26, 1
      %p133 = por %p131, %p132
      %p134 = scmp.ne.s32.totalorder %s125, %s126
      %p135 = scmp.eq.s32.totalorder %s26, 0
      %p136 = por %p134, %p135
      %p137 = scmp.ne.s32.totalorder %s125, %s126
      %p138 = scmp.eq.s32.totalorder %s27, 1
      %p139 = por %p137, %p138
      %p141 = scmp.ne.s32.totalorder %s126, %s140
      %p142 = scmp.eq.s32.totalorder %s27, 0
      %p143 = por %p141, %p142
      %s144 = ssub.s32 %s21, %s28
      %p145 = scmp.eq.s32.totalorder %s144, 0
      %s147 = sadd.s32 %s146, 1
      %s148 = scalar_select %p145, %s146, %s147
      %p151 = pneg %p145
      %p152 = scmp.eq.s32.totalorder %s21, 1
      %p153 = por %p151, %p152
      %p154 = scmp.ne.s32.totalorder %s146, %s149
      %p155 = scmp.eq.s32.totalorder %s21, 0
      %p156 = por %p154, %p155
      %p157 = scmp.ne.s32.totalorder %s146, %s149
      %p158 = scmp.eq.s32.totalorder %s26, 1
      %p159 = por %p157, %p158
      %p160 = scmp.ne.s32.totalorder %s149, %s150
      %p161 = scmp.eq.s32.totalorder %s26, 0
      %p162 = por %p160, %p161
      %p163 = scmp.ne.s32.totalorder %s149, %s150
      %p164 = scmp.eq.s32.totalorder %s27, 1
      %p165 = por %p163, %p164
      %p167 = scmp.ne.s32.totalorder %s150, %s166
      %p168 = scmp.eq.s32.totalorder %s27, 0
      %p169 = por %p167, %p168
      %p170 = scmp.le.s32.totalorder 1, %s21
      %p171 = scmp.lt.s32.totalorder %s21, 3
      %p172 = pnand %p170, %p171
      %p173 = pneg %p172
      // Predicated region
      $region9: #{tpu_custom_call.1} parent=5 // pred_check
        _
      $region10: #{tpu_custom_call.1} parent=5 // pred_check_branch
        %175 = sbr.rel (%p172) target = $region12
      $region11: #{tpu_custom_call.1} parent=5 // pred_region
        %s176 = ssub.s32 %s21, 1
        // Predicated region
        $region13: #{tpu_custom_call.1} parent=11 // pred_check
          %p177 = pneg %p94
        $region14: #{tpu_custom_call.1} parent=11 // pred_check_branch
          %179 = sbr.rel (%p177) target = $region16
        $region15: #{tpu_custom_call.1} parent=11 // pred_region
          %181 = vsyncadd [#allocation6], 0
          %s182 = sshll.u32 %s2, 4
          %s183 = int_to_ptr.hbm [resolvable:$true] %s182
          %s184 = sshll.u32 [#allocation7], 4
          %s185 = int_to_ptr.vmem [resolvable:$true] %s184
          %190 = dma.hbm_to_vmem [thread:$0]  %s183, 8192, %s185, [#allocation6], 128, 128, 8
        $region16: #{tpu_custom_call.1} parent=11 // pred_fallthru
          _
        // Predicated region
        $region17: #{tpu_custom_call.1} parent=11 // pred_check
          %p191 = pneg %p115
        $region18: #{tpu_custom_call.1} parent=11 // pred_check_branch
          %193 = sbr.rel (%p191) target = $region20
        $region19: #{tpu_custom_call.1} parent=11 // pred_region
          %195 = vsyncadd [#allocation9], 0
          %s196 = sshll.u32 %s3, 4
          %s197 = int_to_ptr.hbm [resolvable:$true] %s196
          %s198 = sshll.u32 [#allocation8], 4
          %s199 = int_to_ptr.vmem [resolvable:$true] %s198
          %204 = dma.hbm_to_vmem [thread:$0]  %s197, 6272, %s199, [#allocation9], 128, 128, 8
        $region20: #{tpu_custom_call.1} parent=11 // pred_fallthru
          _
        // Predicated region
        $region21: #{tpu_custom_call.1} parent=11 // pred_check
          %p205 = pneg %p136
        $region22: #{tpu_custom_call.1} parent=11 // pred_check_branch
          %207 = sbr.rel (%p205) target = $region24
        $region23: #{tpu_custom_call.1} parent=11 // pred_region
          %209 = vsyncadd [#allocation9], 0
          %s211 = sshll.u32 %s4, 4
          %s212 = int_to_ptr.hbm [resolvable:$true] %s211
          %s213 = sshll.u32 [#allocation10], 4
          %s214 = int_to_ptr.vmem [resolvable:$true] %s213
          %216 = dma.hbm_to_vmem [thread:$0]  %s212, 128, %s214, [#allocation9]
        $region24: #{tpu_custom_call.1} parent=11 // pred_fallthru
          _
      $region12: #{tpu_custom_call.1} parent=5 // pred_fallthru
        _
      %p217 = scmp.lt.s32.totalorder %s21, 2
      // Predicated region
      $region25: #{tpu_custom_call.1} parent=5 // pred_check
        %p218 = pneg %p217
      $region26: #{tpu_custom_call.1} parent=5 // pred_check_branch
        %220 = sbr.rel (%p218) target = $region28
      $region27: #{tpu_custom_call.1} parent=5 // pred_region
        // Predicated region
        $region29: #{tpu_custom_call.1} parent=27 // pred_check
          %p221 = pneg %p41
        $region30: #{tpu_custom_call.1} parent=27 // pred_check_branch
          %223 = sbr.rel (%p221) target = $region32
        $region31: #{tpu_custom_call.1} parent=27 // pred_region
          %s224 = sand.u32 %s31, 1
          %s225 = scalar_lea.sflag [#allocation3], %s224
          %s226 = sand.u32 %s31, 1
          %s227 = smul.addr %s226, 8
          %s228 = scalar_lea.vmem [#allocation2], %s227
          %230 = vsyncadd %s225, 0
          %s231 = smul.addr %s21, 8
          %s232 = scalar_lea.hbm %s0, %s231
          %s234 = sshll.u32 %s232, 4
          %s235 = int_to_ptr.hbm [resolvable:$true] %s234
          %s236 = sshll.u32 %s228, 4
          %s237 = int_to_ptr.vmem [resolvable:$true] %s236
          %239 = dma.hbm_to_vmem [thread:$0]  %s235, 128, %s237, %s225
        $region32: #{tpu_custom_call.1} parent=27 // pred_fallthru
          _
        // Predicated region
        $region33: #{tpu_custom_call.1} parent=27 // pred_check
          %p240 = pneg %p67
        $region34: #{tpu_custom_call.1} parent=27 // pred_check_branch
          %242 = sbr.rel (%p240) target = $region36
        $region35: #{tpu_custom_call.1} parent=27 // pred_region
          %s243 = sand.u32 %s21, 1
          %s244 = scalar_lea.sflag [#allocation6], %s243
          %s245 = sand.u32 %s57, 1
          %s246 = smul.addr %s245, 32
          %s247 = scalar_lea.vmem [#allocation5], %s246
          %249 = vsyncadd %s244, 0
          %s250 = smul.addr %s21, 4
          %s251 = smul.addr %s250, 8
          %s252 = scalar_lea.hbm %s1, %s251
          %s254 = sshll.u32 %s252, 4
          %s255 = int_to_ptr.hbm [resolvable:$true] %s254
          %s256 = sshll.u32 %s247, 4
          %s257 = int_to_ptr.vmem [resolvable:$true] %s256
          %259 = dma.hbm_to_vmem [thread:$0]  %s255, 512, %s257, %s244
        $region36: #{tpu_custom_call.1} parent=27 // pred_fallthru
          _
      $region28: #{tpu_custom_call.1} parent=5 // pred_fallthru
        _
      %p260 = scmp.le.s32.totalorder 1, %s21
      %p261 = scmp.lt.s32.totalorder %s21, 3
      %p262 = pnand %p260, %p261
      %p263 = pneg %p262
      // Predicated region
      $region37: #{tpu_custom_call.1} parent=5 // pred_check
        _
      $region38: #{tpu_custom_call.1} parent=5 // pred_check_branch
        %265 = sbr.rel (%p262) target = $region40
      $region39: #{tpu_custom_call.1} parent=5 // pred_region
        %s266 = ssub.s32 %s21, 1
        %s267 = sand.u32 %s34, 1
        %s268 = scalar_lea.sflag [#allocation3], %s267
        %s269 = sand.u32 %s34, 1
        %s270 = smul.addr %s269, 8
        %s271 = scalar_lea.vmem [#allocation2], %s270
        // Predicated region
        $region41: #{tpu_custom_call.1} parent=39 // pred_check
          %p272 = pneg %p47
        $region42: #{tpu_custom_call.1} parent=39 // pred_check_branch
          %274 = sbr.rel (%p272) target = $region44
        $region43: #{tpu_custom_call.1} parent=39 // pred_region
          %276 = dma.done %s268, 128
        $region44: #{tpu_custom_call.1} parent=39 // pred_fallthru
          _
        %s277 = sand.u32 %s26, 1
        %s278 = scalar_lea.sflag [#allocation6], %s277
        %s279 = sand.u32 %s60, 1
        %s280 = smul.addr %s279, 32
        %s281 = scalar_lea.vmem [#allocation5], %s280
        // Predicated region
        $region45: #{tpu_custom_call.1} parent=39 // pred_check
          %p282 = pneg %p73
        $region46: #{tpu_custom_call.1} parent=39 // pred_check_branch
          %284 = sbr.rel (%p282) target = $region48
        $region47: #{tpu_custom_call.1} parent=39 // pred_region
          %286 = dma.done %s278, 512
        $region48: #{tpu_custom_call.1} parent=39 // pred_fallthru
          _
        // Predicated region
        $region49: #{tpu_custom_call.1} parent=39 // pred_check
          %p287 = pneg %p94
        $region50: #{tpu_custom_call.1} parent=39 // pred_check_branch
          %289 = sbr.rel (%p287) target = $region52
        $region51: #{tpu_custom_call.1} parent=39 // pred_region
          %291 = dma.done [#allocation6], 8192
        $region52: #{tpu_custom_call.1} parent=39 // pred_fallthru
          _
        // Predicated region
        $region53: #{tpu_custom_call.1} parent=39 // pred_check
          %p292 = pneg %p115
        $region54: #{tpu_custom_call.1} parent=39 // pred_check_branch
          %294 = sbr.rel (%p292) target = $region56
        $region55: #{tpu_custom_call.1} parent=39 // pred_region
          %296 = dma.done [#allocation9], 6272
        $region56: #{tpu_custom_call.1} parent=39 // pred_fallthru
          _
        // Predicated region
        $region57: #{tpu_custom_call.1} parent=39 // pred_check
          %p297 = pneg %p136
        $region58: #{tpu_custom_call.1} parent=39 // pred_check_branch
          %299 = sbr.rel (%p297) target = $region60
        $region59: #{tpu_custom_call.1} parent=39 // pred_region
          %301 = dma.done [#allocation9], 128
        $region60: #{tpu_custom_call.1} parent=39 // pred_fallthru
          _
        %s302 = sand.u32 %s34, 1
        %s303 = scalar_lea.sflag [#allocation3], %s302
        %s304 = sand.u32 %s34, 1
        %s305 = smul.addr %s304, 8
        %s306 = scalar_lea.vmem [#allocation2], %s305
        %p307 = pneg %p47
        %p308 = pneg %p44
        %s309 = sand.u32 %s26, 1
        %s310 = scalar_lea.sflag [#allocation6], %s309
        %s311 = sand.u32 %s60, 1
        %s312 = smul.addr %s311, 32
        %s313 = scalar_lea.vmem [#allocation5], %s312
        %p314 = pneg %p73
        %p315 = pneg %p70
        %p316 = pneg %p94
        %p317 = pneg %p91
        %p318 = pneg %p115
        %p319 = pneg %p112
        %p320 = pneg %p136
        %p321 = pneg %p133
        %p322 = pneg %p162
        %p323 = pneg %p159
        %s324 = sand.u32 %s149, 1
        %s325 = scalar_lea.sflag [#allocation4], %s324
        %s326 = sand.u32 %s149, 1
        %s327 = smul.addr %s326, 8
        %s328 = scalar_lea.vmem [#allocation11], %s327
        %v329 = vld [vmem:[%s271] sm:$0xff]
        %v330 = vld [vmem:[#allocation7] sm:$0xff]
        %v331 = vld [vmem:[#allocation7 + $0x8] sm:$0xff]
        %v332 = vld [vmem:[#allocation7 + $0x10] sm:$0xff]
        %v333 = vld [vmem:[#allocation7 + $0x18] sm:$0xff]
        %v334 = vld [vmem:[#allocation7 + $0x20] sm:$0xff]
        %v335 = vld [vmem:[#allocation7 + $0x28] sm:$0xff]
        %v336 = vld [vmem:[#allocation7 + $0x30] sm:$0xff]
        %v337 = vld [vmem:[#allocation7 + $0x38] sm:$0xff]
        %v338 = vld [vmem:[#allocation7 + $0x40] sm:$0xff]
        %v339 = vld [vmem:[#allocation7 + $0x48] sm:$0xff]
        %v340 = vld [vmem:[#allocation7 + $0x50] sm:$0xff]
        %v341 = vld [vmem:[#allocation7 + $0x58] sm:$0xff]
        %v342 = vld [vmem:[#allocation7 + $0x60] sm:$0xff]
        %v343 = vld [vmem:[#allocation7 + $0x68] sm:$0xff]
        %v344 = vld [vmem:[#allocation7 + $0x70] sm:$0xff]
        %v345 = vld [vmem:[#allocation7 + $0x78] sm:$0xff]
        %v346 = vld [vmem:[#allocation10] sm:$0x1]
        %v347 = vperm.slane %v346, 0
        %348 = vmatpush.msra.mxu0 %v345
        %349 = vmatpush.msra.mxu0 %v344
        %350 = vmatpush.msra.mxu0 %v343
        %351 = vmatpush.msra.mxu0 %v342
        %352 = vmatpush.msra.mxu0 %v341
        %353 = vmatpush.msra.mxu0 %v340
        %354 = vmatpush.msra.mxu0 %v339
        %355 = vmatpush.msra.mxu0 %v338
        %356 = vmatpush.msra.mxu0 %v337
        %357 = vmatpush.msra.mxu0 %v336
        %358 = vmatpush.msra.mxu0 %v335
        %359 = vmatpush.msra.mxu0 %v334
        %360 = vmatpush.msra.mxu0 %v333
        %361 = vmatpush.msra.mxu0 %v332
        %362 = vmatpush.msra.mxu0 %v331
        %363 = vmatpush.msra.mxu0 %v330
        %364 = vmatmul.f32.gmra.mxu0 %v329
        %v365 = vpop.f32.mrf.mxu0
        %v366 = vadd.f32 %v347, %v365
        %367 = vdwg.mxu0
        %v368 = vxor.u32 %v366, 2147483648
        %v369 = vmul.f32 %v368, 1.442695
        %v370 = vpow.pop %v369
        %v371 = vadd.f32 %v370, 1.0
        %v372 = vrcp.pop %v371
        %v373 = vmul.f32 %v371, %v372
        %v374 = vsub.f32 1.0, %v373
        %v375 = vmul.f32 %v372, %v374
        %v376 = vadd.f32 %v372, %v375
        %vm377 = vweird.f32 %v371
        %vm378 = vweird.f32 %v372
        %vm379 = vmor %vm377, %vm378
        %v380 = vsel %vm379, %v372, %v376
        %v381 = vand.u32 2147483647, %v371
        %vm382 = vcmp.eq.f32.partialorder %v381, 8.507059e+37
        %v383 = vand.u32 %v371, 2147483648
        %v384 = vor.u32 1.1754944e-38, %v383
        %v385 = vsel %vm382, %v384, %v380
        %v386 = vmul.f32 1.0, %v385
        %v387 = vld [vmem:[#allocation7 + $0x80] sm:$0xff]
        %v388 = vld [vmem:[#allocation7 + $0x88] sm:$0xff]
        %v389 = vld [vmem:[#allocation7 + $0x90] sm:$0xff]
        %v390 = vld [vmem:[#allocation7 + $0x98] sm:$0xff]
        %v391 = vld [vmem:[#allocation7 + $0xa0] sm:$0xff]
        %v392 = vld [vmem:[#allocation7 + $0xa8] sm:$0xff]
        %v393 = vld [vmem:[#allocation7 + $0xb0] sm:$0xff]
        %v394 = vld [vmem:[#allocation7 + $0xb8] sm:$0xff]
        %v395 = vld [vmem:[#allocation7 + $0xc0] sm:$0xff]
        %v396 = vld [vmem:[#allocation7 + $0xc8] sm:$0xff]
        %v397 = vld [vmem:[#allocation7 + $0xd0] sm:$0xff]
        %v398 = vld [vmem:[#allocation7 + $0xd8] sm:$0xff]
        %v399 = vld [vmem:[#allocation7 + $0xe0] sm:$0xff]
        %v400 = vld [vmem:[#allocation7 + $0xe8] sm:$0xff]
        %v401 = vld [vmem:[#allocation7 + $0xf0] sm:$0xff]
        %v402 = vld [vmem:[#allocation7 + $0xf8] sm:$0xff]
        %v403 = vld [vmem:[%s281] sm:$0xff]
        %v404 = vld [vmem:[%s281 + $0x8] sm:$0xff]
        %v405 = vld [vmem:[%s281 + $0x10] sm:$0xff]
        %v406 = vld [vmem:[%s281 + $0x18] sm:$0xff]
        %v407 = vld [vmem:[#allocation8] sm:$0xff]
        %v408 = vld [vmem:[#allocation8 + $0x8] sm:$0xff]
        %v409 = vld [vmem:[#allocation8 + $0x10] sm:$0xff]
        %v410 = vld [vmem:[#allocation8 + $0x18] sm:$0xff]
        %v411 = vld [vmem:[#allocation8 + $0x20] sm:$0xff]
        %v412 = vld [vmem:[#allocation8 + $0x28] sm:$0xff]
        %v413 = vld [vmem:[#allocation8 + $0x30] sm:$0xff]
        %v414 = vld [vmem:[#allocation8 + $0x38] sm:$0xff]
        %v415 = vld [vmem:[#allocation8 + $0x40] sm:$0xff]
        %v416 = vld [vmem:[#allocation8 + $0x48] sm:$0xff]
        %v417 = vld [vmem:[#allocation8 + $0x50] sm:$0xff]
        %v418 = vld [vmem:[#allocation8 + $0x58] sm:$0xff]
        %v419 = vld [vmem:[#allocation8 + $0x60] sm:$0xff]
        %v420 = vld [vmem:[#allocation8 + $0x68] sm:$0xff]
        %v421 = vld [vmem:[#allocation8 + $0x70] sm:$0xff]
        %v422 = vld [vmem:[#allocation8 + $0x78] sm:$0xff]
        %v423 = vld [vmem:[#allocation8 + $0x80] sm:$0xff]
        %v424 = vld [vmem:[#allocation8 + $0x88] sm:$0xff]
        %v425 = vld [vmem:[#allocation8 + $0x90] sm:$0xff]
        %v426 = vld [vmem:[#allocation8 + $0x98] sm:$0xff]
        %v427 = vld [vmem:[#allocation8 + $0xa0] sm:$0xff]
        %v428 = vld [vmem:[#allocation8 + $0xa8] sm:$0xff]
        %v429 = vld [vmem:[#allocation8 + $0xb0] sm:$0xff]
        %v430 = vld [vmem:[#allocation8 + $0xb8] sm:$0xff]
        %v431 = vld [vmem:[#allocation8 + $0xc0] sm:$0xff]
        %v432 = vld [vmem:[#allocation8 + $0xc8] sm:$0xff]
        %v433 = vld [vmem:[#allocation8 + $0xd0] sm:$0xff]
        %v434 = vld [vmem:[#allocation8 + $0xd8] sm:$0xff]
        %v435 = vld [vmem:[#allocation8 + $0xe0] sm:$0xff]
        %v436 = vld [vmem:[#allocation8 + $0xe8] sm:$0xff]
        %v437 = vld [vmem:[#allocation8 + $0xf0] sm:$0xff]
        %v438 = vld [vmem:[#allocation8 + $0xf8] sm:$0xff]
        %v439 = vld [vmem:[#allocation8 + $0x100] sm:$0xff]
        %v440 = vld [vmem:[#allocation8 + $0x108] sm:$0xff]
        %v441 = vld [vmem:[#allocation8 + $0x110] sm:$0xff]
        %v442 = vld [vmem:[#allocation8 + $0x118] sm:$0xff]
        %v443 = vld [vmem:[#allocation8 + $0x120] sm:$0xff]
        %v444 = vld [vmem:[#allocation8 + $0x128] sm:$0xff]
        %v445 = vld [vmem:[#allocation8 + $0x130] sm:$0xff]
        %v446 = vld [vmem:[#allocation8 + $0x138] sm:$0xff]
        %v447 = vld [vmem:[#allocation8 + $0x140] sm:$0xff]
        %v448 = vld [vmem:[#allocation8 + $0x148] sm:$0xff]
        %v449 = vld [vmem:[#allocation8 + $0x150] sm:$0xff]
        %v450 = vld [vmem:[#allocation8 + $0x158] sm:$0xff]
        %v451 = vld [vmem:[#allocation8 + $0x160] sm:$0xff]
        %v452 = vld [vmem:[#allocation8 + $0x168] sm:$0xff]
        %v453 = vld [vmem:[#allocation8 + $0x170] sm:$0xff]
        %v454 = vld [vmem:[#allocation8 + $0x178] sm:$0xff]
        %v455 = vld [vmem:[#allocation8 + $0x180] sm:$0xf]
        %vm456 = vcmask 31744
        %v458 = vsel %vm456, %v406, 0
        %vm460 = vcmask 1043456
        %v462 = vsel %vm460, %v455, 0
        %464 = vmatpush.msra.mxu0 %v422
        %465 = vmatpush.msra.mxu0 %v421
        %466 = vmatpush.msra.mxu0 %v420
        %467 = vmatpush.msra.mxu0 %v419
        %468 = vmatpush.msra.mxu0 %v418
        %469 = vmatpush.msra.mxu0 %v417
        %470 = vmatpush.msra.mxu0 %v416
        %471 = vmatpush.msra.mxu0 %v415
        %472 = vmatpush.msra.mxu0 %v414
        %473 = vmatpush.msra.mxu0 %v413
        %474 = vmatpush.msra.mxu0 %v412
        %475 = vmatpush.msra.mxu0 %v411
        %476 = vmatpush.msra.mxu0 %v410
        %477 = vmatpush.msra.mxu0 %v409
        %478 = vmatpush.msra.mxu0 %v408
        %479 = vmatpush.msra.mxu0 %v407
        %480 = vmatmul.f32.gmra.mxu0 %v403
        %v481 = vpop.f32.mrf.mxu0
        %v482 = vadd.f32 0.0, %v481
        %483 = vdwg.mxu0
        %484 = vmatpush.msra.mxu0 %v438
        %485 = vmatpush.msra.mxu0 %v437
        %486 = vmatpush.msra.mxu0 %v436
        %487 = vmatpush.msra.mxu0 %v435
        %488 = vmatpush.msra.mxu0 %v434
        %489 = vmatpush.msra.mxu0 %v433
        %490 = vmatpush.msra.mxu0 %v432
        %491 = vmatpush.msra.mxu0 %v431
        %492 = vmatpush.msra.mxu0 %v430
        %493 = vmatpush.msra.mxu0 %v429
        %494 = vmatpush.msra.mxu0 %v428
        %495 = vmatpush.msra.mxu0 %v427
        %496 = vmatpush.msra.mxu0 %v426
        %497 = vmatpush.msra.mxu0 %v425
        %498 = vmatpush.msra.mxu0 %v424
        %499 = vmatpush.msra.mxu0 %v423
        %500 = vmatmul.f32.gmra.mxu0 %v404
        %v501 = vpop.f32.mrf.mxu0
        %v502 = vadd.f32 %v482, %v501
        %503 = vdwg.mxu0
        %504 = vmatpush.msra.mxu0 %v454
        %505 = vmatpush.msra.mxu0 %v453
        %506 = vmatpush.msra.mxu0 %v452
        %507 = vmatpush.msra.mxu0 %v451
        %508 = vmatpush.msra.mxu0 %v450
        %509 = vmatpush.msra.mxu0 %v449
        %510 = vmatpush.msra.mxu0 %v448
        %511 = vmatpush.msra.mxu0 %v447
        %512 = vmatpush.msra.mxu0 %v446
        %513 = vmatpush.msra.mxu0 %v445
        %514 = vmatpush.msra.mxu0 %v444
        %515 = vmatpush.msra.mxu0 %v443
        %516 = vmatpush.msra.mxu0 %v442
        %517 = vmatpush.msra.mxu0 %v441
        %518 = vmatpush.msra.mxu0 %v440
        %519 = vmatpush.msra.mxu0 %v439
        %520 = vmatmul.f32.gmra.mxu0 %v405
        %v521 = vpop.f32.mrf.mxu0
        %v522 = vadd.f32 %v502, %v521
        %523 = vdwg.mxu0
        %524 = vmatpush.msra.mxu0 0.0
        %525 = vmatpush.msra.mxu0 0.0
        %526 = vmatpush.msra.mxu0 0.0
        %527 = vmatpush.msra.mxu0 0.0
        %528 = vmatpush.msra.mxu0 0.0
        %529 = vmatpush.msra.mxu0 0.0
        %530 = vmatpush.msra.mxu0 0.0
        %531 = vmatpush.msra.mxu0 0.0
        %532 = vmatpush.msra.mxu0 0.0
        %533 = vmatpush.msra.mxu0 0.0
        %534 = vmatpush.msra.mxu0 0.0
        %535 = vmatpush.msra.mxu0 0.0
        %536 = vmatpush.msra.mxu0 0.0
        %537 = vmatpush.msra.mxu0 0.0
        %538 = vmatpush.msra.mxu0 0.0
        %539 = vmatpush.msra.mxu0 %v462
        %540 = vmatmul.f32.gmra.mxu0 %v458
        %v541 = vpop.f32.mrf.mxu0
        %v542 = vadd.f32 %v522, %v541
        %543 = vdwg.mxu0
        %544 = vmatpush.msra.mxu0 %v402
        %545 = vmatpush.msra.mxu0 %v401
        %546 = vmatpush.msra.mxu0 %v400
        %547 = vmatpush.msra.mxu0 %v399
        %548 = vmatpush.msra.mxu0 %v398
        %549 = vmatpush.msra.mxu0 %v397
        %550 = vmatpush.msra.mxu0 %v396
        %551 = vmatpush.msra.mxu0 %v395
        %552 = vmatpush.msra.mxu0 %v394
        %553 = vmatpush.msra.mxu0 %v393
        %554 = vmatpush.msra.mxu0 %v392
        %555 = vmatpush.msra.mxu0 %v391
        %556 = vmatpush.msra.mxu0 %v390
        %557 = vmatpush.msra.mxu0 %v389
        %558 = vmatpush.msra.mxu0 %v388
        %559 = vmatpush.msra.mxu0 %v387
        %560 = vmatmul.f32.gmra.mxu0 %v386
        %v561 = vpop.f32.mrf.mxu0
        %v562 = vadd.f32 %v542, %v561
        %563 = vdwg.mxu0
        %v564 = vld [vmem:[#allocation10 + $0x1] sm:$0x1]
        %v565 = vperm.slane %v564, 0
        %v566 = vadd.f32 %v562, %v565
        %v567 = vxor.u32 %v566, 2147483648
        %v568 = vmul.f32 %v567, 1.442695
        %v569 = vpow.pop %v568
        %v570 = vadd.f32 %v569, 1.0
        %v571 = vrcp.pop %v570
        %v572 = vmul.f32 %v570, %v571
        %v573 = vsub.f32 1.0, %v572
        %v574 = vmul.f32 %v571, %v573
        %v575 = vadd.f32 %v571, %v574
        %vm576 = vweird.f32 %v570
        %vm577 = vweird.f32 %v571
        %vm578 = vmor %vm576, %vm577
        %v579 = vsel %vm578, %v571, %v575
        %v580 = vand.u32 2147483647, %v570
        %vm581 = vcmp.eq.f32.partialorder %v580, 8.507059e+37
        %v582 = vand.u32 %v570, 2147483648
        %v583 = vor.u32 1.1754944e-38, %v582
        %v584 = vsel %vm581, %v583, %v579
        %v585 = vmul.f32 1.0, %v584
        %v586 = vld [vmem:[#allocation7 + $0x100] sm:$0xff]
        %v587 = vld [vmem:[#allocation7 + $0x108] sm:$0xff]
        %v588 = vld [vmem:[#allocation7 + $0x110] sm:$0xff]
        %v589 = vld [vmem:[#allocation7 + $0x118] sm:$0xff]
        %v590 = vld [vmem:[#allocation7 + $0x120] sm:$0xff]
        %v591 = vld [vmem:[#allocation7 + $0x128] sm:$0xff]
        %v592 = vld [vmem:[#allocation7 + $0x130] sm:$0xff]
        %v593 = vld [vmem:[#allocation7 + $0x138] sm:$0xff]
        %v594 = vld [vmem:[#allocation7 + $0x140] sm:$0xff]
        %v595 = vld [vmem:[#allocation7 + $0x148] sm:$0xff]
        %v596 = vld [vmem:[#allocation7 + $0x150] sm:$0xff]
        %v597 = vld [vmem:[#allocation7 + $0x158] sm:$0xff]
        %v598 = vld [vmem:[#allocation7 + $0x160] sm:$0xff]
        %v599 = vld [vmem:[#allocation7 + $0x168] sm:$0xff]
        %v600 = vld [vmem:[#allocation7 + $0x170] sm:$0xff]
        %v601 = vld [vmem:[#allocation7 + $0x178] sm:$0xff]
        %v602 = vld [vmem:[#allocation10 + $0x2] sm:$0x1]
        %v603 = vperm.slane %v602, 0
        %604 = vmatpush.msra.mxu0 %v601
        %605 = vmatpush.msra.mxu0 %v600
        %606 = vmatpush.msra.mxu0 %v599
        %607 = vmatpush.msra.mxu0 %v598
        %608 = vmatpush.msra.mxu0 %v597
        %609 = vmatpush.msra.mxu0 %v596
        %610 = vmatpush.msra.mxu0 %v595
        %611 = vmatpush.msra.mxu0 %v594
        %612 = vmatpush.msra.mxu0 %v593
        %613 = vmatpush.msra.mxu0 %v592
        %614 = vmatpush.msra.mxu0 %v591
        %615 = vmatpush.msra.mxu0 %v590
        %616 = vmatpush.msra.mxu0 %v589
        %617 = vmatpush.msra.mxu0 %v588
        %618 = vmatpush.msra.mxu0 %v587
        %619 = vmatpush.msra.mxu0 %v586
        %620 = vmatmul.f32.gmra.mxu0 %v585
        %v621 = vpop.f32.mrf.mxu0
        %v622 = vadd.f32 %v603, %v621
        %623 = vdwg.mxu0
        %v624 = vxor.u32 %v622, 2147483648
        %v625 = vmul.f32 %v624, 1.442695
        %v626 = vpow.pop %v625
        %v627 = vadd.f32 %v626, 1.0
        %v628 = vrcp.pop %v627
        %v629 = vmul.f32 %v627, %v628
        %v630 = vsub.f32 1.0, %v629
        %v631 = vmul.f32 %v628, %v630
        %v632 = vadd.f32 %v628, %v631
        %vm633 = vweird.f32 %v627
        %vm634 = vweird.f32 %v628
        %vm635 = vmor %vm633, %vm634
        %v636 = vsel %vm635, %v628, %v632
        %v637 = vand.u32 2147483647, %v627
        %vm638 = vcmp.eq.f32.partialorder %v637, 8.507059e+37
        %v639 = vand.u32 %v627, 2147483648
        %v640 = vor.u32 1.1754944e-38, %v639
        %v641 = vsel %vm638, %v640, %v636
        %v642 = vmul.f32 1.0, %v641
        %v643 = vld [vmem:[#allocation7 + $0x180] sm:$0xff]
        %v644 = vld [vmem:[#allocation7 + $0x188] sm:$0xff]
        %v645 = vld [vmem:[#allocation7 + $0x190] sm:$0xff]
        %v646 = vld [vmem:[#allocation7 + $0x198] sm:$0xff]
        %v647 = vld [vmem:[#allocation7 + $0x1a0] sm:$0xff]
        %v648 = vld [vmem:[#allocation7 + $0x1a8] sm:$0xff]
        %v649 = vld [vmem:[#allocation7 + $0x1b0] sm:$0xff]
        %v650 = vld [vmem:[#allocation7 + $0x1b8] sm:$0xff]
        %v651 = vld [vmem:[#allocation7 + $0x1c0] sm:$0xff]
        %v652 = vld [vmem:[#allocation7 + $0x1c8] sm:$0xff]
        %v653 = vld [vmem:[#allocation7 + $0x1d0] sm:$0xff]
        %v654 = vld [vmem:[#allocation7 + $0x1d8] sm:$0xff]
        %v655 = vld [vmem:[#allocation7 + $0x1e0] sm:$0xff]
        %v656 = vld [vmem:[#allocation7 + $0x1e8] sm:$0xff]
        %v657 = vld [vmem:[#allocation7 + $0x1f0] sm:$0xff]
        %v658 = vld [vmem:[#allocation7 + $0x1f8] sm:$0xff]
        %v659 = vld [vmem:[#allocation10 + $0x3] sm:$0x1]
        %v660 = vperm.slane %v659, 0
        %661 = vmatpush.msra.mxu0 %v658
        %662 = vmatpush.msra.mxu0 %v657
        %663 = vmatpush.msra.mxu0 %v656
        %664 = vmatpush.msra.mxu0 %v655
        %665 = vmatpush.msra.mxu0 %v654
        %666 = vmatpush.msra.mxu0 %v653
        %667 = vmatpush.msra.mxu0 %v652
        %668 = vmatpush.msra.mxu0 %v651
        %669 = vmatpush.msra.mxu0 %v650
        %670 = vmatpush.msra.mxu0 %v649
        %671 = vmatpush.msra.mxu0 %v648
        %672 = vmatpush.msra.mxu0 %v647
        %673 = vmatpush.msra.mxu0 %v646
        %674 = vmatpush.msra.mxu0 %v645
        %675 = vmatpush.msra.mxu0 %v644
        %676 = vmatpush.msra.mxu0 %v643
        %677 = vmatmul.f32.gmra.mxu0 %v642
        %v678 = vpop.f32.mrf.mxu0
        %v679 = vadd.f32 %v660, %v678
        %680 = vdwg.mxu0
        %v681 = vxor.u32 %v679, 2147483648
        %v682 = vmul.f32 %v681, 1.442695
        %v683 = vpow.pop %v682
        %v684 = vadd.f32 %v683, 1.0
        %v685 = vrcp.pop %v684
        %v686 = vmul.f32 %v684, %v685
        %v687 = vsub.f32 1.0, %v686
        %v688 = vmul.f32 %v685, %v687
        %v689 = vadd.f32 %v685, %v688
        %vm690 = vweird.f32 %v684
        %vm691 = vweird.f32 %v685
        %vm692 = vmor %vm690, %vm691
        %v693 = vsel %vm692, %v685, %v689
        %v694 = vand.u32 2147483647, %v684
        %vm695 = vcmp.eq.f32.partialorder %v694, 8.507059e+37
        %v696 = vand.u32 %v684, 2147483648
        %v697 = vor.u32 1.1754944e-38, %v696
        %v698 = vsel %vm695, %v697, %v693
        %v699 = vmul.f32 1.0, %v698
        %700 = vst [vmem:[%s328] sm:$0xff] %v699
        %s701 = sand.u32 %s149, 1
        %s702 = scalar_lea.sflag [#allocation4], %s701
        %s703 = sand.u32 %s149, 1
        %s704 = smul.addr %s703, 8
        %s705 = scalar_lea.vmem [#allocation11], %s704
        // Predicated region
        $region61: #{tpu_custom_call.1} parent=39 // pred_check
          %p706 = pneg %p159
        $region62: #{tpu_custom_call.1} parent=39 // pred_check_branch
          %708 = sbr.rel (%p706) target = $region64
        $region63: #{tpu_custom_call.1} parent=39 // pred_region
          %710 = vsyncadd %s702, 0
          %s711 = smul.addr %s26, 8
          %s712 = scalar_lea.hbm %s5, %s711
          %s714 = sshll.u32 %s705, 4
          %s715 = int_to_ptr.vmem [resolvable:$true] %s714
          %s716 = sshll.u32 %s712, 4
          %s717 = int_to_ptr.hbm [resolvable:$true] %s716
          %719 = dma.vmem_to_hbm [thread:$0]  %s715, 128, %s717, %s702
        $region64: #{tpu_custom_call.1} parent=39 // pred_fallthru
          _
      $region40: #{tpu_custom_call.1} parent=5 // pred_fallthru
        _
      %p720 = scmp.le.s32.totalorder 2, %s21
      // Predicated region
      $region65: #{tpu_custom_call.1} parent=5 // pred_check
        %p721 = pneg %p720
      $region66: #{tpu_custom_call.1} parent=5 // pred_check_branch
        %723 = sbr.rel (%p721) target = $region68
      $region67: #{tpu_custom_call.1} parent=5 // pred_region
        %s724 = ssub.s32 %s21, 2
        // Predicated region
        $region69: #{tpu_custom_call.1} parent=67 // pred_check
          %p725 = pneg %p165
        $region70: #{tpu_custom_call.1} parent=67 // pred_check_branch
          %727 = sbr.rel (%p725) target = $region72
        $region71: #{tpu_custom_call.1} parent=67 // pred_region
          %s728 = sand.u32 %s150, 1
          %s729 = scalar_lea.sflag [#allocation4], %s728
          %s730 = sand.u32 %s150, 1
          %s731 = smul.addr %s730, 8
          %s732 = scalar_lea.vmem [#allocation11], %s731
          %734 = dma.done %s729, 128
        $region72: #{tpu_custom_call.1} parent=67 // pred_fallthru
          _
      $region68: #{tpu_custom_call.1} parent=5 // pred_fallthru
        _
    $region6: #{tpu_custom_call.1} parent=1 // loop_footer
      %s25 = sadd.s32 1, %s21
    $region7: #{tpu_custom_call.1} parent=1 // loop_footer_branch
      %20 = sbr.rel target = $region3
    $region8: #{tpu_custom_call.1} parent=1 // loop_exit
      _
    %735 = vsyncpa [#allocation3], 1
    %s736 = scalar_lea.sflag [#allocation3], 1
    %737 = vsyncpa %s736, 1
    %738 = vsyncpa [#allocation6], 1
    %s739 = scalar_lea.sflag [#allocation6], 1
    %740 = vsyncpa %s739, 1
    %741 = vsyncpa [#allocation9], 1
    %742 = vsyncpa [#allocation4], 1
    %s743 = scalar_lea.sflag [#allocation4], 1
    %744 = vsyncpa %s743, 1

</llo_original>
